<compile_context>
chip_gen: v6e
topology: v6e:2x2x1
jax: 0.10.0
libtpu: 0.0.40
codegen_flags: <defaults>
</compile_context>

<pallas_src>
import math

import jax
import jax.numpy as jnp
from jax.experimental import pallas as pl
from jax.experimental.pallas import tpu as pltpu

_CLAMP_MIN = 1e-6
_CLAMP_MAX = 1e6


def _logvar_kernel(x_ref, o_ref):
    # x_ref: (pre_tile, n, cols_tile) in VMEM; reduce over axis=-2 (sublanes).
    x = x_ref[...].astype(jnp.float32)
    n = x.shape[-2]
    mean = jnp.sum(x, axis=-2, keepdims=True) * (1.0 / n)
    d = x - mean
    # torch.Tensor.var default is unbiased (correction=1).
    denom = n - 1 if n > 1 else 1
    var = jnp.sum(d * d, axis=-2, keepdims=True) * (1.0 / denom)
    var = jnp.clip(var, _CLAMP_MIN, _CLAMP_MAX)
    o_ref[...] = jnp.log(var).astype(o_ref.dtype)  # log -> EUP slot, essentially free


def _logvar_reduce_mid(x3):
    """log(clamp(var, 1e-6, 1e6)) along the middle axis of a 3-D array (keepdims)."""
    pre, n, cols = x3.shape

    # Lane (last-dim) tile: large & lane-dense. Either the full extent or a
    # multiple of 128 so every block (incl. edge blocks) is legal.
    cols_tile = cols if cols <= 1024 else 1024

    # Leading-dim tile: biggest block that keeps the double-buffered input
    # comfortably inside scoped VMEM on every chip generation.
    max_block_elems = (6 * 1024 * 1024) // 4          # ~6 MiB of f32 per buffer
    pre_tile = max(1, min(pre, max_block_elems // max(n * cols_tile, 1)))

    grid = (pl.cdiv(pre, pre_tile), pl.cdiv(cols, cols_tile))

    return pl.pallas_call(
        _logvar_kernel,
        out_shape=jax.ShapeDtypeStruct((pre, 1, cols), x3.dtype),
        grid=grid,
        in_specs=[pl.BlockSpec((pre_tile, n, cols_tile), lambda i, j: (i, 0, j))],
        out_specs=pl.BlockSpec((pre_tile, 1, cols_tile), lambda i, j: (i, 0, j)),
        compiler_params=pltpu.CompilerParams(
            dimension_semantics=("parallel", "parallel"),
            vmem_limit_bytes=32 * 1024 * 1024,
        ),
    )(x3)


class LogVarLayer:
    """JAX/Pallas equivalent of the PyTorch LogVarLayer (log of clamped variance)."""

    def __init__(self, dim):
        self.dim = dim

    def __call__(self, x):
        dim = self.dim % x.ndim
        shape = x.shape
        n = shape[dim]

        if dim == x.ndim - 1:
            # Reduction axis is the (lane) last axis in native layout. One XLA
            # transpose presents it as (1, n, rows): sublane reduction inside the
            # kernel with a fully lane-dense output store.
            rows = math.prod(shape[:-1])
            x3 = jnp.transpose(x.reshape(rows, n))[None, :, :]       # (1, n, rows)
            out3 = _logvar_reduce_mid(x3)                            # (1, 1, rows)
            return out3.reshape(shape[:-1] + (1,))

        # Reduction axis is a middle axis: the (pre, n, post) reshape is free
        # (contiguous) — no transpose / no extra HBM pass needed.
        pre = math.prod(shape[:dim])
        post = math.prod(shape[dim + 1:])
        x3 = x.reshape(pre, n, post)
        out3 = _logvar_reduce_mid(x3)                                # (pre, 1, post)
        return out3.reshape(shape[:dim] + (1,) + shape[dim + 1:])


if __name__ == "__main__":
    key = jax.random.PRNGKey(0)
    # NCHW-style input, small shapes: batch=2, channels=4, H=16, W=16.
    x = jax.random.normal(key, (2, 4, 16, 16), dtype=jnp.float32)

    # GLCNet usage: log-variance along the temporal (last) axis, keepdim=True.
    layer = LogVarLayer(dim=3)
    y = layer(x)
    jax.block_until_ready(y)
    ref = jnp.log(jnp.clip(jnp.var(x, axis=3, ddof=1, keepdims=True),
                           _CLAMP_MIN, _CLAMP_MAX))
    assert y.shape == ref.shape, (y.shape, ref.shape)
    assert bool(jnp.allclose(y, ref, rtol=1e-5, atol=1e-5)), "dim=3 mismatch"

    # Also exercise the no-transpose (middle-axis) path.
    layer2 = LogVarLayer(dim=2)
    y2 = layer2(x)
    jax.block_until_ready(y2)
    ref2 = jnp.log(jnp.clip(jnp.var(x, axis=2, ddof=1, keepdims=True),
                            _CLAMP_MIN, _CLAMP_MAX))
    assert y2.shape == ref2.shape, (y2.shape, ref2.shape)
    assert bool(jnp.allclose(y2, ref2, rtol=1e-5, atol=1e-5)), "dim=2 mismatch"

    print("KERNEL_OK")
</pallas_src>

<mosaic_0001>
module attributes {stable_mosaic.version = 11 : i64} {
  func.func @_logvar_kernel(%arg0: i32, %arg1: i32, %arg2: memref<1x16x128xf32, #tpu.memory_space<vmem>>, %arg3: memref<1x1x128xf32, #tpu.memory_space<vmem>>) attributes {dimension_semantics = [#tpu.dimension_semantics<parallel>, #tpu.dimension_semantics<parallel>], iteration_bounds = array<i64: 1, 1>, scalar_prefetch = 0 : i64, scratch_operands = 0 : i64, tpu.core_type = #tpu.core_type<tc>, window_params = [{transform_indices = @transform_0, window_bounds = array<i64: 1, 16, 128>}, {transform_indices = @transform_1, window_bounds = array<i64: 1, 1, 128>}]} {
    %c0 = arith.constant 0 : index
    %c0_0 = arith.constant 0 : index
    %c0_1 = arith.constant 0 : index
    %0 = vector.load %arg2[%c0, %c0_0, %c0_1] : memref<1x16x128xf32, #tpu.memory_space<vmem>>, vector<1x16x128xf32>
    %cst = arith.constant dense<0.000000e+00> : vector<1x128xf32>
    %1 = vector.multi_reduction <add>, %0, %cst [1] : vector<1x16x128xf32> to vector<1x128xf32>
    %2 = vector.shape_cast %1 : vector<1x128xf32> to vector<1x1x128xf32>
    %cst_2 = arith.constant 6.250000e-02 : f32
    %3 = vector.broadcast %cst_2 : f32 to vector<1x1x128xf32>
    %4 = arith.mulf %2, %3 : vector<1x1x128xf32>
    %5 = vector.broadcast %4 : vector<1x1x128xf32> to vector<1x16x128xf32>
    %6 = arith.subf %0, %5 : vector<1x16x128xf32>
    %7 = arith.mulf %6, %6 : vector<1x16x128xf32>
    %cst_3 = arith.constant dense<0.000000e+00> : vector<1x128xf32>
    %8 = vector.multi_reduction <add>, %7, %cst_3 [1] : vector<1x16x128xf32> to vector<1x128xf32>
    %9 = vector.shape_cast %8 : vector<1x128xf32> to vector<1x1x128xf32>
    %cst_4 = arith.constant 0.0666666701 : f32
    %10 = vector.broadcast %cst_4 : f32 to vector<1x1x128xf32>
    %11 = arith.mulf %9, %10 : vector<1x1x128xf32>
    %cst_5 = arith.constant 9.99999997E-7 : f32
    %cst_6 = arith.constant 1.000000e+06 : f32
    %12 = vector.broadcast %cst_5 : f32 to vector<1x1x128xf32>
    %13 = arith.maximumf %12, %11 : vector<1x1x128xf32>
    %14 = vector.broadcast %cst_6 : f32 to vector<1x1x128xf32>
    %15 = arith.minimumf %14, %13 : vector<1x1x128xf32>
    %16 = math.log %15 : vector<1x1x128xf32>
    %c0_7 = arith.constant 0 : index
    %c0_8 = arith.constant 0 : index
    %c0_9 = arith.constant 0 : index
    %17 = vector.load %arg3[%c0_7, %c0_8, %c0_9] : memref<1x1x128xf32, #tpu.memory_space<vmem>>, vector<1x1x128xf32>
    tpu.vector_store %arg3[%c0_7, %c0_8, %c0_9], %16 {strides = array<i32>} : memref<1x1x128xf32, #tpu.memory_space<vmem>>, vector<1x1x128xf32>,
    return
  }
  func.func @transform_0(%arg0: i32, %arg1: i32) -> (i32, i32, i32) {
    %c0_i32 = arith.constant 0 : i32
    %c0_i32_0 = arith.constant 0 : i32
    return %arg0, %c0_i32, %arg1 : i32, i32, i32
  }
  func.func @transform_1(%arg0: i32, %arg1: i32) -> (i32, i32, i32) {
    %c0_i32 = arith.constant 0 : i32
    %c0_i32_0 = arith.constant 0 : i32
    return %arg0, %c0_i32, %arg1 : i32, i32, i32
  }
}

</mosaic_0001>

<llo_original>
// kernel: tpu_custom_call.1
$region0: #{tpu_custom_call.1}
  #allocation0 [shape = 'u32[]', space=smem, size = 0x4, offset = 0x4, fixed_abs, tag = 'smem constant byte address 0x4 - core index']
  #allocation1 [shape = 'u32[144,128]{1,0:T(1,128)}', space=vmem, size = 0x12000, scoped, tag = 'internal scratch']
  %s0 = inlined_call_operand.hbm [shape: f32[1,16,128], index: 0, kind: input, shape index: {}]
  %s1 = inlined_call_operand.hbm [shape: f32[1,1,128], index: 1, kind: output, shape index: {}]
  %s2 = sld [smem:[#allocation0]]
  $region18: #{tpu_custom_call.1} parent=0
    _
  %s4 = ssub.s32 1, %s2
  %s5 = scalar_select 0, %s4, %s2
  $region1: #{tpu_custom_call.1} parent=0
    #allocation2 [shape = 'u8[8192]{0}', space=vmem, size = 0x2000, scoped, tag = 'input window, operand 0, single buffered']
    #allocation3 [shape = 's32[1]{0}', space=sflag, size = 0x4, scoped, tag = 'scoped memory for tpu_custom_call.1']
    #allocation4 [shape = 's32[1]{0}', space=sflag, size = 0x4, scoped, tag = 'scoped memory for tpu_custom_call.1']
    #allocation5 [shape = 'u8[512]{0}', space=vmem, size = 0x400, scoped, tag = 'output window, operand 0, single buffered']
    %6 = vsyncpa [#allocation3], 0
    %7 = vsyncpa [#allocation4], 0
    // Predicated region
    $region2: #{tpu_custom_call.1} parent=1 // pred_check
      _
    $region3: #{tpu_custom_call.1} parent=1 // pred_check_branch
      %9 = sbr.rel (0) target = $region5
    $region4: #{tpu_custom_call.1} parent=1 // pred_region
      %s11 = ssub.s32 256, 256
      %12 = vsyncadd [#allocation3], %s11
      %s13 = sshll.u32 [#allocation2], 4
      %s14 = int_to_ptr.vmem [resolvable:$true] %s13
      %19 = dma.hbm_to_vmem [thread:$0]  %s0, 256, %s14, [#allocation3], 128, 128, 8
    $region5: #{tpu_custom_call.1} parent=1 // pred_fallthru
      _
    // Predicated region
    $region6: #{tpu_custom_call.1} parent=1 // pred_check
      _
    $region7: #{tpu_custom_call.1} parent=1 // pred_check_branch
      %21 = sbr.rel (0) target = $region9
    $region8: #{tpu_custom_call.1} parent=1 // pred_region
      %22 = dma.done [#allocation3], 256
    $region9: #{tpu_custom_call.1} parent=1 // pred_fallthru
      _
    %v23 = vld [vmem:[#allocation2] sm:$0xff]
    %v24 = vld [vmem:[#allocation2 + $0x8] sm:$0xff]
    %v25 = vadd.f32 %v23, %v24
    %v26 = vrot.slane %v25, 4
    %v27 = vadd.f32 %v25, %v26
    %v28 = vrot.slane %v27, 2
    %v29 = vadd.f32 %v27, %v28
    %v30 = vrot.slane %v29, 1
    %v31 = vadd.f32 %v29, %v30
    %v32 = vmul.f32 %v31, 0.0625
    %v33 = vsub.f32 %v23, %v32
    %v34 = vsub.f32 %v24, %v32
    %v35 = vmul.f32 %v33, %v33
    %v36 = vmul.f32 %v34, %v34
    %v37 = vadd.f32 %v35, %v36
    %v38 = vrot.slane %v37, 4
    %v39 = vadd.f32 %v37, %v38
    %v40 = vrot.slane %v39, 2
    %v41 = vadd.f32 %v39, %v40
    %v42 = vrot.slane %v41, 1
    %v43 = vadd.f32 %v41, %v42
    %v44 = vmul.f32 %v43, 0.06666667
    %v45 = vmax.f32 %v44, 1e-06
    %v46 = vmin.f32 %v45, 1000000.0
    %v47 = vlog2.pop %v46
    %v48 = vmul.f32 %v47, 0.6931472
    %49 = vst [vmem:[#allocation5] sm:$0x1] %v48
    // Predicated region
    $region10: #{tpu_custom_call.1} parent=1 // pred_check
      _
    $region11: #{tpu_custom_call.1} parent=1 // pred_check_branch
      %51 = sbr.rel (0) target = $region13
    $region12: #{tpu_custom_call.1} parent=1 // pred_region
      %s53 = ssub.s32 16, 16
      %54 = vsyncadd [#allocation4], %s53
      %s56 = sshll.u32 [#allocation5], 4
      %s57 = int_to_ptr.vmem [resolvable:$true] %s56
      %59 = dma.vmem_to_hbm [thread:$0]  %s57, 16, %s1, [#allocation4]
    $region13: #{tpu_custom_call.1} parent=1 // pred_fallthru
      _
    // Predicated region
    $region14: #{tpu_custom_call.1} parent=1 // pred_check
      _
    $region15: #{tpu_custom_call.1} parent=1 // pred_check_branch
      %61 = sbr.rel (0) target = $region17
    $region16: #{tpu_custom_call.1} parent=1 // pred_region
      %62 = dma.done [#allocation4], 16
    $region17: #{tpu_custom_call.1} parent=1 // pred_fallthru
      _
    %63 = vsyncpa [#allocation3], 1
    %64 = vsyncpa [#allocation4], 1

</llo_original>
